<compile_context>
chip_gen: v7x
topology: tpu7x:2x2x1
jax: 0.10.0
libtpu: 0.0.40
codegen_flags: <defaults>
</compile_context>

<pallas_src>
import jax
import jax.numpy as jnp
from jax.experimental import pallas as pl
from jax.experimental.pallas import tpu as pltpu


def _linear2x2_interleaved_kernel(ws_ref, wo_ref, b_ref, x_ref, o_ref):
    """y = x @ W^T + b on a lane-interleaved [x0, x1, x0, x1, ...] slab.

    ws_ref, wo_ref, b_ref : (1, 128) f32 resident coefficient rows
        even lane: ws = W[0,0], wo = W[0,1], b = b[0]   (produces y0)
        odd  lane: ws = W[1,1], wo = W[1,0], b = b[1]   (produces y1)
    x_ref, o_ref          : (bm, 128) f32 tiles of the flat slab
    """
    t = x_ref[...]
    # The other feature of each sample sits in the adjacent lane of the pair:
    # lane+1 for even lanes, lane-1 for odd lanes.  Axis size == 128, so both
    # rotations are intra-vreg XLU lane rolls; pick the right one by parity.
    nxt = pltpu.roll(t, 127, axis=1)          # t[:, (l + 1) % 128]
    prv = pltpu.roll(t, 1, axis=1)            # t[:, (l - 1) % 128]
    lane = jax.lax.broadcasted_iota(jnp.int32, t.shape, 1)
    partner = jnp.where((lane & 1) == 0, nxt, prv)
    o_ref[...] = (ws_ref[...] * t + wo_ref[...] * partner + b_ref[...]).astype(o_ref.dtype)


def _pick_block_rows(n_rows: int) -> int:
    """Rows of the (n_rows, 128) slab processed per grid step."""
    MAX_BLOCK_ROWS = 2048      # 2048 x 128 f32 = 1 MiB/block; in+out double-buffered ~4 MiB
    bm = -(-n_rows // 4)       # aim for >= ~4 grid steps (v7x 2-TC sharding + DMA overlap)
    bm = -(-bm // 8) * 8       # round up to a sublane multiple
    return max(1, min(MAX_BLOCK_ROWS, bm, n_rows))


def softmax_classifier_forward(x, weight, bias, *, min_pallas_batch=4096):
    """Pallas-backed equivalent of SoftmaxClassifier.forward (nn.Linear(2, 2))."""
    B, in_features = x.shape
    out_features, in_features_w = weight.shape
    assert in_features == 2 and in_features_w == 2 and out_features == 2

    # Fast path: tiny batches are dominated by launch cost, and batches whose
    # flat size 2B is not a multiple of 128 cannot be viewed as a slab without
    # a copy.  Exact f32 on the VPU in plain XLA is already optimal there.
    if B < min_pallas_batch or (2 * B) % 128 != 0:
        return (x[:, None, :] * weight[None, :, :]).sum(axis=-1) + bias

    n = 2 * B
    n_rows = n // 128
    # Free, row-major view: lane l of the slab holds feature (l % 2).
    x_slab = x.reshape(n_rows, 128)

    bm = _pick_block_rows(n_rows)
    grid = (pl.cdiv(n_rows, bm),)

    # Pre-expanded per-lane coefficients (stay resident in VMEM across the grid).
    lane = jnp.arange(128) % 2
    w_self = jnp.where(lane == 0, weight[0, 0], weight[1, 1]).reshape(1, 128).astype(x.dtype)
    w_other = jnp.where(lane == 0, weight[0, 1], weight[1, 0]).reshape(1, 128).astype(x.dtype)
    b_row = jnp.where(lane == 0, bias[0], bias[1]).reshape(1, 128).astype(x.dtype)

    y_slab = pl.pallas_call(
        _linear2x2_interleaved_kernel,
        out_shape=jax.ShapeDtypeStruct((n_rows, 128), x.dtype),
        grid=grid,
        in_specs=[
            pl.BlockSpec((1, 128), lambda i: (0, 0)),     # w_self row (resident)
            pl.BlockSpec((1, 128), lambda i: (0, 0)),     # w_other row (resident)
            pl.BlockSpec((1, 128), lambda i: (0, 0)),     # bias row (resident)
            pl.BlockSpec((bm, 128), lambda i: (i, 0)),    # x slab tile
        ],
        out_specs=pl.BlockSpec((bm, 128), lambda i: (i, 0)),
        compiler_params=pltpu.CompilerParams(
            dimension_semantics=("parallel",),
            vmem_limit_bytes=32 * 1024 * 1024,   # headroom over v5e's 16 MiB scoped default
        ),
        cost_estimate=pl.CostEstimate(
            flops=4 * n, transcendentals=0,
            bytes_accessed=2 * n * x.dtype.itemsize),
    )(w_self, w_other, b_row, x_slab)

    # Free view back to the PyTorch (B, 2) layout.
    return y_slab.reshape(B, 2)


if __name__ == "__main__":
    key = jax.random.PRNGKey(0)
    kx, kw, kb = jax.random.split(key, 3)

    IN, OUT = 2, 2
    # Deterministic parameter init mimicking nn.Linear's uniform(-1/sqrt(in), 1/sqrt(in))
    bound = 1.0 / jnp.sqrt(jnp.float32(IN))
    weight = jax.random.uniform(kw, (OUT, IN), dtype=jnp.float32,
                                minval=-bound, maxval=bound)
    bias = jax.random.uniform(kb, (OUT,), dtype=jnp.float32,
                              minval=-bound, maxval=bound)

    def reference(x):
        # Exact f32 reference on the VPU (avoids MXU rounding in the check itself).
        return (x[:, None, :] * weight[None, :, :]).sum(axis=-1) + bias

    # B=8     -> small-batch XLA fast path (default threshold)
    # B=256   -> Pallas kernel, single full-extent block
    # B=1600  -> Pallas kernel, multi-step grid with a masked partial last block
    for B, thresh in ((8, 4096), (256, 1), (1600, 1)):
        x = jax.random.normal(jax.random.fold_in(kx, B), (B, IN), dtype=jnp.float32)
        y = softmax_classifier_forward(x, weight, bias, min_pallas_batch=thresh)
        jax.block_until_ready(y)
        y_ref = reference(x)
        assert y.shape == y_ref.shape
        assert jnp.allclose(y, y_ref, atol=1e-5, rtol=1e-5), f"mismatch vs reference at B={B}"

    print("KERNEL_OK")
</pallas_src>

<mosaic_0001>
module attributes {stable_mosaic.version = 11 : i64} {
  func.func @_linear2x2_interleaved_kernel(%arg0: i32, %arg1: memref<1x128xf32, #tpu.memory_space<vmem>>, %arg2: memref<1x128xf32, #tpu.memory_space<vmem>>, %arg3: memref<1x128xf32, #tpu.memory_space<vmem>>, %arg4: memref<4x128xf32, #tpu.memory_space<vmem>>, %arg5: memref<4x128xf32, #tpu.memory_space<vmem>>) attributes {dimension_semantics = [#tpu.dimension_semantics<parallel>], iteration_bounds = array<i64: 1>, scalar_prefetch = 0 : i64, scratch_operands = 0 : i64, tpu.core_type = #tpu.core_type<tc>, window_params = [{pipeline_mode = #tpu.pipeline_mode<synchronous>, transform_indices = @transform_0, window_bounds = array<i64: 1, 128>}, {pipeline_mode = #tpu.pipeline_mode<synchronous>, transform_indices = @transform_1, window_bounds = array<i64: 1, 128>}, {pipeline_mode = #tpu.pipeline_mode<synchronous>, transform_indices = @transform_2, window_bounds = array<i64: 1, 128>}, {transform_indices = @transform_3, window_bounds = array<i64: 4, 128>}, {transform_indices = @transform_4, window_bounds = array<i64: 4, 128>}]} {
    %c0 = arith.constant 0 : index
    %c0_0 = arith.constant 0 : index
    %0 = vector.load %arg4[%c0, %c0_0] : memref<4x128xf32, #tpu.memory_space<vmem>>, vector<4x128xf32>
    %c127_i32 = arith.constant 127 : i32
    %1 = tpu.dynamic_rotate %0 by %c127_i32 dim 1 : vector<4x128xf32>, i32 -> vector<4x128xf32>
    %c1_i32 = arith.constant 1 : i32
    %2 = tpu.dynamic_rotate %0 by %c1_i32 dim 1 : vector<4x128xf32>, i32 -> vector<4x128xf32>
    %3 = tpu.iota {dimensions = array<i32: 1>} : vector<4x128xi32>
    %c1_i32_1 = arith.constant 1 : i32
    %4 = vector.broadcast %c1_i32_1 : i32 to vector<4x128xi32>
    %5 = arith.andi %3, %4 : vector<4x128xi32>
    %c0_i32 = arith.constant 0 : i32
    %6 = vector.broadcast %c0_i32 : i32 to vector<4x128xi32>
    %7 = arith.cmpi eq, %5, %6 : vector<4x128xi32>
    %8 = arith.select %7, %1, %2 : vector<4x128xi1>, vector<4x128xf32>
    %c0_2 = arith.constant 0 : index
    %c0_3 = arith.constant 0 : index
    %9 = vector.load %arg1[%c0_2, %c0_3] : memref<1x128xf32, #tpu.memory_space<vmem>>, vector<1x128xf32>
    %10 = vector.broadcast %9 : vector<1x128xf32> to vector<4x128xf32>
    %11 = arith.mulf %10, %0 : vector<4x128xf32>
    %c0_4 = arith.constant 0 : index
    %c0_5 = arith.constant 0 : index
    %12 = vector.load %arg2[%c0_4, %c0_5] : memref<1x128xf32, #tpu.memory_space<vmem>>, vector<1x128xf32>
    %13 = vector.broadcast %12 : vector<1x128xf32> to vector<4x128xf32>
    %14 = arith.mulf %13, %8 : vector<4x128xf32>
    %15 = arith.addf %11, %14 : vector<4x128xf32>
    %c0_6 = arith.constant 0 : index
    %c0_7 = arith.constant 0 : index
    %16 = vector.load %arg3[%c0_6, %c0_7] : memref<1x128xf32, #tpu.memory_space<vmem>>, vector<1x128xf32>
    %17 = vector.broadcast %16 : vector<1x128xf32> to vector<4x128xf32>
    %18 = arith.addf %15, %17 : vector<4x128xf32>
    %c0_8 = arith.constant 0 : index
    %c0_9 = arith.constant 0 : index
    %19 = vector.load %arg5[%c0_8, %c0_9] : memref<4x128xf32, #tpu.memory_space<vmem>>, vector<4x128xf32>
    tpu.vector_store %arg5[%c0_8, %c0_9], %18 {strides = array<i32>} : memref<4x128xf32, #tpu.memory_space<vmem>>, vector<4x128xf32>,
    return
  }
  func.func @transform_0(%arg0: i32) -> (i32, i32) {
    %c0_i32 = arith.constant 0 : i32
    %c0_i32_0 = arith.constant 0 : i32
    %c0_i32_1 = arith.constant 0 : i32
    return %c0_i32, %c0_i32_0 : i32, i32
  }
  func.func @transform_1(%arg0: i32) -> (i32, i32) {
    %c0_i32 = arith.constant 0 : i32
    %c0_i32_0 = arith.constant 0 : i32
    %c0_i32_1 = arith.constant 0 : i32
    return %c0_i32, %c0_i32_0 : i32, i32
  }
  func.func @transform_2(%arg0: i32) -> (i32, i32) {
    %c0_i32 = arith.constant 0 : i32
    %c0_i32_0 = arith.constant 0 : i32
    %c0_i32_1 = arith.constant 0 : i32
    return %c0_i32, %c0_i32_0 : i32, i32
  }
  func.func @transform_3(%arg0: i32) -> (i32, i32) {
    %c0_i32 = arith.constant 0 : i32
    %c0_i32_0 = arith.constant 0 : i32
    return %arg0, %c0_i32 : i32, i32
  }
  func.func @transform_4(%arg0: i32) -> (i32, i32) {
    %c0_i32 = arith.constant 0 : i32
    %c0_i32_0 = arith.constant 0 : i32
    return %arg0, %c0_i32 : i32, i32
  }
}

</mosaic_0001>

<llo_original>
// kernel: tpu_custom_call.1
$region0: #{tpu_custom_call.1}
  #allocation0 [shape = 'u32[]', space=smem, size = 0x4, offset = 0x4, fixed_abs, tag = 'smem constant byte address 0x4 - core index']
  #allocation1 [shape = 'u32[144,128]{1,0:T(1,128)}', space=vmem, size = 0x12000, scoped, tag = 'internal scratch']
  %s0 = inlined_call_operand.hbm [shape: f32[1,128], index: 0, kind: input, shape index: {}]
  %s1 = inlined_call_operand.vmem [shape: f32[1,128], index: 1, kind: input, shape index: {}]
  %s2 = inlined_call_operand.vmem [shape: f32[1,128], index: 2, kind: input, shape index: {}]
  %s3 = inlined_call_operand.vmem [shape: f32[4,128], index: 3, kind: input, shape index: {}]
  %s4 = inlined_call_operand.hbm [shape: f32[4,128], index: 4, kind: output, shape index: {}]
  %s5 = sld [smem:[#allocation0]]
  $region30: #{tpu_custom_call.1} parent=0
    _
  %s7 = ssub.s32 1, %s5
  %s8 = scalar_select 0, %s7, %s5
  $region1: #{tpu_custom_call.1} parent=0
    #allocation2 [shape = 'u8[512]{0}', space=vmem, size = 0x400, scoped, tag = 'input window, operand 0, single buffered']
    #allocation3 [shape = 's32[1]{0}', space=sflag, size = 0x4, scoped, tag = 'scoped memory for tpu_custom_call.1']
    #allocation4 [shape = 's32[1]{0}', space=sflag, size = 0x4, scoped, tag = 'scoped memory for tpu_custom_call.1']
    #allocation5 [shape = 'u8[2048]{0}', space=vmem, size = 0x800, scoped, tag = 'output window, operand 0, single buffered']
    %9 = vsyncpa [#allocation3], 0
    %10 = vsyncpa [#allocation4], 0
    // Predicated region
    $region2: #{tpu_custom_call.1} parent=1 // pred_check
      _
    $region3: #{tpu_custom_call.1} parent=1 // pred_check_branch
      %12 = sbr.rel (0) target = $region5
    $region4: #{tpu_custom_call.1} parent=1 // pred_region
      %s14 = ssub.s32 16, 16
      %15 = vsyncadd [#allocation3], %s14
      %s17 = sshll.u32 [#allocation2], 4
      %s18 = int_to_ptr.vmem [resolvable:$true] %s17
      %20 = dma.hbm_to_vmem [thread:$0]  %s0, 16, %s18, [#allocation3]
    $region5: #{tpu_custom_call.1} parent=1 // pred_fallthru
      _
    // Predicated region
    $region6: #{tpu_custom_call.1} parent=1 // pred_check
      _
    $region7: #{tpu_custom_call.1} parent=1 // pred_check_branch
      %22 = sbr.rel (0) target = $region9
    $region8: #{tpu_custom_call.1} parent=1 // pred_region
      _
    $region9: #{tpu_custom_call.1} parent=1 // pred_fallthru
      _
    // Predicated region
    $region10: #{tpu_custom_call.1} parent=1 // pred_check
      _
    $region11: #{tpu_custom_call.1} parent=1 // pred_check_branch
      %24 = sbr.rel (0) target = $region13
    $region12: #{tpu_custom_call.1} parent=1 // pred_region
      _
    $region13: #{tpu_custom_call.1} parent=1 // pred_fallthru
      _
    // Predicated region
    $region14: #{tpu_custom_call.1} parent=1 // pred_check
      _
    $region15: #{tpu_custom_call.1} parent=1 // pred_check_branch
      %26 = sbr.rel (0) target = $region17
    $region16: #{tpu_custom_call.1} parent=1 // pred_region
      _
    $region17: #{tpu_custom_call.1} parent=1 // pred_fallthru
      _
    // Predicated region
    $region18: #{tpu_custom_call.1} parent=1 // pred_check
      _
    $region19: #{tpu_custom_call.1} parent=1 // pred_check_branch
      %28 = sbr.rel (0) target = $region21
    $region20: #{tpu_custom_call.1} parent=1 // pred_region
      %29 = dma.done [#allocation3], 16
    $region21: #{tpu_custom_call.1} parent=1 // pred_fallthru
      _
    %v30 = vld [vmem:[%s3] sm:$0xf]
    %31 = vrot.lane.b32.xlu0 %v30, 127
    %v32 = vpop.permute.xlu0 %31
    %33 = vrot.lane.b32.xlu0 %v30, 1
    %v34 = vpop.permute.xlu0 %33
    %v35 = vlaneseq
    %v36 = vand.u32 %v35, 127
    %v37 = vand.u32 %v36, 1
    %vm38 = vcmp.eq.s32.totalorder %v37, 0
    %v39 = vsel %vm38, %v32, %v34
    %v40 = vld [vmem:[#allocation2] sm:$0x1]
    %v42 = vlaneseq
    %v43 = vshrl.u32 %v42, 7
    %v44 = vsub.s32 0, %v43
    %v45 = vrot.slane %v40, %v44
    %v47 = vmul.f32 %v45, %v30
    %v48 = vld [vmem:[%s1] sm:$0x1]
    %v50 = vlaneseq
    %v51 = vshrl.u32 %v50, 7
    %v52 = vsub.s32 0, %v51
    %v53 = vrot.slane %v48, %v52
    %v55 = vmul.f32 %v53, %v39
    %v56 = vadd.f32 %v47, %v55
    %v57 = vld [vmem:[%s2] sm:$0x1]
    %v59 = vlaneseq
    %v60 = vshrl.u32 %v59, 7
    %v61 = vsub.s32 0, %v60
    %v62 = vrot.slane %v57, %v61
    %v64 = vadd.f32 %v56, %v62
    %65 = vst [vmem:[#allocation5] sm:$0xf] %v64
    // Predicated region
    $region22: #{tpu_custom_call.1} parent=1 // pred_check
      _
    $region23: #{tpu_custom_call.1} parent=1 // pred_check_branch
      %67 = sbr.rel (0) target = $region25
    $region24: #{tpu_custom_call.1} parent=1 // pred_region
      %s69 = ssub.s32 64, 64
      %70 = vsyncadd [#allocation4], %s69
      %s72 = sshll.u32 [#allocation5], 4
      %s73 = int_to_ptr.vmem [resolvable:$true] %s72
      %75 = dma.vmem_to_hbm [thread:$0]  %s73, 64, %s4, [#allocation4]
    $region25: #{tpu_custom_call.1} parent=1 // pred_fallthru
      _
    // Predicated region
    $region26: #{tpu_custom_call.1} parent=1 // pred_check
      _
    $region27: #{tpu_custom_call.1} parent=1 // pred_check_branch
      %77 = sbr.rel (0) target = $region29
    $region28: #{tpu_custom_call.1} parent=1 // pred_region
      %78 = dma.done [#allocation4], 64
    $region29: #{tpu_custom_call.1} parent=1 // pred_fallthru
      _
    %79 = vsyncpa [#allocation3], 1
    %80 = vsyncpa [#allocation4], 1

</llo_original>
